<compile_context>
chip_gen: v7x
topology: tpu7x:2x2x1
jax: 0.10.0
libtpu: 0.0.40
codegen_flags: <defaults>
</compile_context>

<pallas_src>
from functools import partial

import jax
import jax.numpy as jnp
import numpy as np
from jax import lax
from jax.experimental import pallas as pl
from jax.experimental.pallas import tpu as pltpu

INPUT_DIMS = 32
HIDDEN_DIMS = 64
OUTPUT_DIMS = 32
BATCH = 2
SEQ = 8
LN_EPS = 1e-5

# Rows per grid step. For the shapes in this script (N = 16 rows) this means ONE grid step on
# every chip (v5e/v6e/v7x): splitting a latency-bound kernel across cores only duplicates the
# weight DMAs and pipeline prologues. Large N falls back to a row-block grid for pipelining.
_MAX_ROWS_PER_BLOCK = 1024


def residual_block_kernel(
    x_ref, w_in_ref, w_out_ref, vec_ref, out_ref, *, hidden_dims, output_dims, layer_norm,
):
    """Fused: [hidden|residual] matmul -> SiLU -> output matmul -> +residual -> optional LN."""
    x = x_ref[...]                                                    # [tm, D_in]
    fused_dim = hidden_dims + output_dims

    # Packed vector operand layout: [ b1|br (fused_dim) | b2 (D_out) | ln_w (D_out) | ln_b (D_out) ]
    b_in = vec_ref[:, :fused_dim]                                     # [1, H + D_out]
    b_out = vec_ref[:, fused_dim:fused_dim + output_dims]             # [1, D_out]

    # One MXU matmul for both projections that read x (QKV-fusion analog):
    #   [tm, D_in] @ [D_in, H + D_out] == [ hidden_layer | residual_layer ]
    fused = jnp.dot(x, w_in_ref[...], preferred_element_type=jnp.float32) + b_in
    h_pre = fused[:, :hidden_dims]                                    # [tm, H]
    residual = fused[:, hidden_dims:]                                 # [tm, D_out]

    # hidden_layer activation = SiLU (sigmoid lowers to the EUP slot)
    hidden = h_pre * jax.nn.sigmoid(h_pre)

    # output_layer (Identity activation); dropout p=0 -> identity; residual add
    y = jnp.dot(hidden, w_out_ref[...], preferred_element_type=jnp.float32) + b_out + residual

    if layer_norm:                                                    # nn.LayerNorm(output_dims)
        ln_w = vec_ref[:, fused_dim + output_dims:fused_dim + 2 * output_dims]
        ln_b = vec_ref[:, fused_dim + 2 * output_dims:fused_dim + 3 * output_dims]
        mu = jnp.mean(y, axis=-1, keepdims=True)
        yc = y - mu
        var = jnp.mean(yc * yc, axis=-1, keepdims=True)
        y = yc * lax.rsqrt(var + LN_EPS) * ln_w + ln_b

    out_ref[...] = y.astype(out_ref.dtype)


def prepare_params(params, *, layer_norm=False):
    """One-time parameter plumbing (OUTSIDE the hot path): fuse [w1|wr], pack all small
    vectors into a single VMEM operand, fix dtypes. Call once, reuse across forwards."""
    f32 = jnp.float32
    w_in = jnp.concatenate([params["w1"], params["wr"]], axis=1).astype(f32)   # [D_in, H+D_out]
    w_out = params["w2"].astype(f32)                                            # [H, D_out]
    vecs = [params["b1"], params["br"], params["b2"]]
    if layer_norm:
        vecs += [params["ln_w"], params["ln_b"]]
    vec = jnp.concatenate([v.astype(f32) for v in vecs], axis=0)[None, :]       # [1, V]
    return {
        "w_in": w_in, "w_out": w_out, "vec": vec,
        "hidden_dims": int(params["w1"].shape[1]),
        "output_dims": int(params["w2"].shape[1]),
        "layer_norm": bool(layer_norm),
    }


def _pick_row_block(n):
    if n <= _MAX_ROWS_PER_BLOCK:
        return n                       # single grid step: best for a latency-bound small call
    for tm in (1024, 512, 256, 128, 64, 32, 16, 8):
        if n % tm == 0:
            return tm
    return n                           # ragged fallback: single block


def residual_block(x, prepared):
    hidden_dims = prepared["hidden_dims"]
    output_dims = prepared["output_dims"]
    layer_norm = prepared["layer_norm"]
    w_in, w_out, vec = prepared["w_in"], prepared["w_out"], prepared["vec"]

    orig_shape = x.shape
    d_in = orig_shape[-1]
    x2 = x.reshape(-1, d_in)
    if x2.dtype != jnp.float32:
        x2 = x2.astype(jnp.float32)
    n = x2.shape[0]

    tm = _pick_row_block(n)
    grid = (n // tm,)
    fused_dim = hidden_dims + output_dims
    vec_width = vec.shape[1]

    cost = pl.CostEstimate(
        flops=2 * n * (d_in * fused_dim + hidden_dims * output_dims),
        transcendentals=n * hidden_dims,                 # sigmoid inside SiLU
        bytes_accessed=4 * (x2.size + w_in.size + w_out.size + vec.size + n * output_dims),
    )

    kernel = partial(residual_block_kernel, hidden_dims=hidden_dims,
                     output_dims=output_dims, layer_norm=layer_norm)

    out2 = pl.pallas_call(
        kernel,
        out_shape=jax.ShapeDtypeStruct((n, output_dims), jnp.float32),
        grid=grid,
        in_specs=[
            pl.BlockSpec((tm, d_in), lambda i: (i, 0)),                    # x row block
            pl.BlockSpec((d_in, fused_dim), lambda i: (0, 0)),             # fused [w1 | wr]
            pl.BlockSpec((hidden_dims, output_dims), lambda i: (0, 0)),    # w2
            pl.BlockSpec((1, vec_width), lambda i: (0, 0)),                # packed [b1|br|b2(|ln_w|ln_b)]
        ],
        out_specs=pl.BlockSpec((tm, output_dims), lambda i: (i, 0)),
        compiler_params=pltpu.CompilerParams(dimension_semantics=("parallel",)),
        cost_estimate=cost,
    )(x2, w_in, w_out, vec)

    return out2.reshape(orig_shape[:-1] + (output_dims,))


def reference_jax(x, params, *, layer_norm=False):
    """Pure-JAX reference mirroring the PyTorch ResidualBlock forward pass."""
    hidden = jax.nn.silu(x @ params["w1"] + params["b1"])     # hidden_layer (SiLU)
    out = hidden @ params["w2"] + params["b2"]                # output_layer (Identity)
    residual = x @ params["wr"] + params["br"]                # residual_layer (Identity)
    y = out + residual                                        # dropout p=0 -> identity
    if layer_norm:
        mu = jnp.mean(y, axis=-1, keepdims=True)
        var = jnp.mean((y - mu) ** 2, axis=-1, keepdims=True)
        y = (y - mu) * lax.rsqrt(var + LN_EPS) * params["ln_w"] + params["ln_b"]
    return y


def init_params(key):
    D, H, O = INPUT_DIMS, HIDDEN_DIMS, OUTPUT_DIMS
    ks = jax.random.split(key, 6)
    s1 = 1.0 / np.sqrt(D)
    s2 = 1.0 / np.sqrt(H)
    return {
        # weights stored as [in, out] (transpose of torch nn.Linear layout)
        "w1": s1 * jax.random.normal(ks[0], (D, H), jnp.float32),
        "b1": s1 * jax.random.normal(ks[1], (H,), jnp.float32),
        "w2": s2 * jax.random.normal(ks[2], (H, O), jnp.float32),
        "b2": s2 * jax.random.normal(ks[3], (O,), jnp.float32),
        "wr": s1 * jax.random.normal(ks[4], (D, O), jnp.float32),
        "br": s1 * jax.random.normal(ks[5], (O,), jnp.float32),
        # LayerNorm params (used only when layer_norm=True)
        "ln_w": jnp.ones((O,), jnp.float32),
        "ln_b": jnp.zeros((O,), jnp.float32),
    }


if __name__ == "__main__":
    key = jax.random.PRNGKey(0)
    kx, kp = jax.random.split(key)
    params = init_params(kp)

    x = jax.random.normal(kx, (BATCH, SEQ, INPUT_DIMS), jnp.float32)

    # Exercise both module configurations: layer_norm=False (default) and layer_norm=True.
    for ln in (False, True):
        prepared = prepare_params(params, layer_norm=ln)   # one-time; reused across forwards
        out = jax.block_until_ready(residual_block(x, prepared))
        ref = jax.block_until_ready(reference_jax(x, params, layer_norm=ln))
        np.testing.assert_allclose(np.asarray(out), np.asarray(ref), rtol=1e-4, atol=1e-4)

    print("KERNEL_OK")
</pallas_src>

<mosaic_0001>
module attributes {stable_mosaic.version = 11 : i64} {
  func.func @residual_block_kernel(%arg0: i32, %arg1: memref<16x32xf32, #tpu.memory_space<vmem>>, %arg2: memref<32x96xf32, #tpu.memory_space<vmem>>, %arg3: memref<64x32xf32, #tpu.memory_space<vmem>>, %arg4: memref<1x128xf32, #tpu.memory_space<vmem>>, %arg5: memref<16x32xf32, #tpu.memory_space<vmem>>) attributes {dimension_semantics = [#tpu.dimension_semantics<parallel>], iteration_bounds = array<i64: 1>, scalar_prefetch = 0 : i64, scratch_operands = 0 : i64, tpu.core_type = #tpu.core_type<tc>, window_params = [{transform_indices = @transform_0, window_bounds = array<i64: 16, 32>}, {pipeline_mode = #tpu.pipeline_mode<synchronous>, transform_indices = @transform_1, window_bounds = array<i64: 32, 96>}, {pipeline_mode = #tpu.pipeline_mode<synchronous>, transform_indices = @transform_2, window_bounds = array<i64: 64, 32>}, {pipeline_mode = #tpu.pipeline_mode<synchronous>, transform_indices = @transform_3, window_bounds = array<i64: 1, 128>}, {transform_indices = @transform_4, window_bounds = array<i64: 16, 32>}]} {
    %c0 = arith.constant 0 : index
    %c0_0 = arith.constant 0 : index
    %0 = vector.load %arg1[%c0, %c0_0] : memref<16x32xf32, #tpu.memory_space<vmem>>, vector<16x32xf32>
    %c0_1 = arith.constant 0 : index
    %c0_2 = arith.constant 0 : index
    %1 = vector.load %arg4[%c0_1, %c0_2] : memref<1x128xf32, #tpu.memory_space<vmem>>, vector<1x96xf32>
    %c0_3 = arith.constant 0 : index
    %c96 = arith.constant 96 : index
    %2 = vector.load %arg4[%c0_3, %c96] : memref<1x128xf32, #tpu.memory_space<vmem>>, vector<1x32xf32>
    %c0_4 = arith.constant 0 : index
    %c0_5 = arith.constant 0 : index
    %3 = vector.load %arg2[%c0_4, %c0_5] : memref<32x96xf32, #tpu.memory_space<vmem>>, vector<32x96xf32>
    %cst = arith.constant dense<0.000000e+00> : vector<16x96xf32>
    %4 = tpu.matmul %0, %3, %cst {dimension_numbers = #tpu.dot_dimension_numbers<[1], [0], [0], [1], [0, 0, 1, 1], [], []>} : vector<16x32xf32>, vector<32x96xf32>, vector<16x96xf32> -> vector<16x96xf32>
    %5 = vector.broadcast %1 : vector<1x96xf32> to vector<16x96xf32>
    %6 = arith.addf %4, %5 : vector<16x96xf32>
    %7 = vector.extract_strided_slice %6 {offsets = [0, 0], sizes = [16, 64], strides = [1, 1]} : vector<16x96xf32> to vector<16x64xf32>
    %8 = vector.extract_strided_slice %6 {offsets = [0, 64], sizes = [16, 32], strides = [1, 1]} : vector<16x96xf32> to vector<16x32xf32>
    %9 = arith.negf %7 : vector<16x64xf32>
    %10 = math.exp %9 : vector<16x64xf32>
    %cst_6 = arith.constant 1.000000e+00 : f32
    %11 = vector.broadcast %cst_6 : f32 to vector<16x64xf32>
    %12 = arith.addf %11, %10 : vector<16x64xf32>
    %13 = arith.divf %11, %12 : vector<16x64xf32>
    %14 = arith.mulf %7, %13 : vector<16x64xf32>
    %c0_7 = arith.constant 0 : index
    %c0_8 = arith.constant 0 : index
    %15 = vector.load %arg3[%c0_7, %c0_8] : memref<64x32xf32, #tpu.memory_space<vmem>>, vector<64x32xf32>
    %cst_9 = arith.constant dense<0.000000e+00> : vector<16x32xf32>
    %16 = tpu.matmul %14, %15, %cst_9 {dimension_numbers = #tpu.dot_dimension_numbers<[1], [0], [0], [1], [0, 0, 1, 1], [], []>} : vector<16x64xf32>, vector<64x32xf32>, vector<16x32xf32> -> vector<16x32xf32>
    %17 = vector.broadcast %2 : vector<1x32xf32> to vector<16x32xf32>
    %18 = arith.addf %16, %17 : vector<16x32xf32>
    %19 = arith.addf %18, %8 : vector<16x32xf32>
    %c0_10 = arith.constant 0 : index
    %c0_11 = arith.constant 0 : index
    %20 = vector.load %arg5[%c0_10, %c0_11] : memref<16x32xf32, #tpu.memory_space<vmem>>, vector<16x32xf32>
    tpu.vector_store %arg5[%c0_10, %c0_11], %19 {strides = array<i32>} : memref<16x32xf32, #tpu.memory_space<vmem>>, vector<16x32xf32>,
    return
  }
  func.func @transform_0(%arg0: i32) -> (i32, i32) {
    %c0_i32 = arith.constant 0 : i32
    %c0_i32_0 = arith.constant 0 : i32
    return %arg0, %c0_i32 : i32, i32
  }
  func.func @transform_1(%arg0: i32) -> (i32, i32) {
    %c0_i32 = arith.constant 0 : i32
    %c0_i32_0 = arith.constant 0 : i32
    %c0_i32_1 = arith.constant 0 : i32
    return %c0_i32, %c0_i32_0 : i32, i32
  }
  func.func @transform_2(%arg0: i32) -> (i32, i32) {
    %c0_i32 = arith.constant 0 : i32
    %c0_i32_0 = arith.constant 0 : i32
    %c0_i32_1 = arith.constant 0 : i32
    return %c0_i32, %c0_i32_0 : i32, i32
  }
  func.func @transform_3(%arg0: i32) -> (i32, i32) {
    %c0_i32 = arith.constant 0 : i32
    %c0_i32_0 = arith.constant 0 : i32
    %c0_i32_1 = arith.constant 0 : i32
    return %c0_i32, %c0_i32_0 : i32, i32
  }
  func.func @transform_4(%arg0: i32) -> (i32, i32) {
    %c0_i32 = arith.constant 0 : i32
    %c0_i32_0 = arith.constant 0 : i32
    return %arg0, %c0_i32 : i32, i32
  }
}

</mosaic_0001>

<llo_original>
// kernel: tpu_custom_call.1
$region0: #{tpu_custom_call.1}
  #allocation0 [shape = 'u32[]', space=smem, size = 0x4, offset = 0x4, fixed_abs, tag = 'smem constant byte address 0x4 - core index']
  #allocation1 [shape = 'u32[144,128]{1,0:T(1,128)}', space=vmem, size = 0x12000, scoped, tag = 'internal scratch']
  %s0 = inlined_call_operand.vmem [shape: f32[16,32], index: 0, kind: input, shape index: {}]
  %s1 = inlined_call_operand.vmem [shape: f32[32,96], index: 1, kind: input, shape index: {}]
  %s2 = inlined_call_operand.vmem [shape: f32[64,32], index: 2, kind: input, shape index: {}]
  %s3 = inlined_call_operand.vmem [shape: f32[1,128], index: 3, kind: input, shape index: {}]
  %s4 = inlined_call_operand.hbm [shape: f32[16,32], index: 4, kind: output, shape index: {}]
  %s5 = sld [smem:[#allocation0]]
  $region26: #{tpu_custom_call.1} parent=0
    _
  %s7 = ssub.s32 1, %s5
  %s8 = scalar_select 0, %s7, %s5
  $region1: #{tpu_custom_call.1} parent=0
    #allocation2 [shape = 'u8[8192]{0}', space=vmem, size = 0x2000, scoped, tag = 'output window, operand 0, single buffered']
    #allocation3 [shape = 's32[1]{0}', space=sflag, size = 0x4, scoped, tag = 'scoped memory for tpu_custom_call.1']
    %9 = vsyncpa [#allocation3], 0
    // Predicated region
    $region2: #{tpu_custom_call.1} parent=1 // pred_check
      _
    $region3: #{tpu_custom_call.1} parent=1 // pred_check_branch
      %11 = sbr.rel (0) target = $region5
    $region4: #{tpu_custom_call.1} parent=1 // pred_region
      _
    $region5: #{tpu_custom_call.1} parent=1 // pred_fallthru
      _
    // Predicated region
    $region6: #{tpu_custom_call.1} parent=1 // pred_check
      _
    $region7: #{tpu_custom_call.1} parent=1 // pred_check_branch
      %13 = sbr.rel (0) target = $region9
    $region8: #{tpu_custom_call.1} parent=1 // pred_region
      _
    $region9: #{tpu_custom_call.1} parent=1 // pred_fallthru
      _
    // Predicated region
    $region10: #{tpu_custom_call.1} parent=1 // pred_check
      _
    $region11: #{tpu_custom_call.1} parent=1 // pred_check_branch
      %15 = sbr.rel (0) target = $region13
    $region12: #{tpu_custom_call.1} parent=1 // pred_region
      _
    $region13: #{tpu_custom_call.1} parent=1 // pred_fallthru
      _
    // Predicated region
    $region14: #{tpu_custom_call.1} parent=1 // pred_check
      _
    $region15: #{tpu_custom_call.1} parent=1 // pred_check_branch
      %17 = sbr.rel (0) target = $region17
    $region16: #{tpu_custom_call.1} parent=1 // pred_region
      _
    $region17: #{tpu_custom_call.1} parent=1 // pred_fallthru
      _
    %v18 = vld [vmem:[%s0] sm:$0xff]
    %v19 = vld [vmem:[%s0 + $0x8] sm:$0xff]
    %v20 = vld [vmem:[%s3] sm:$0x1]
    %v21 = vld [vmem:[%s1] sm:$0xff]
    %v22 = vld [vmem:[%s1 + $0x8] sm:$0xff]
    %v23 = vld [vmem:[%s1 + $0x10] sm:$0xff]
    %v24 = vld [vmem:[%s1 + $0x18] sm:$0xff]
    %v26 = vlaneseq
    %v27 = vshrl.u32 %v26, 7
    %v28 = vsub.s32 0, %v27
    %v29 = vrot.slane %v20, %v28
    %vm31 = vcmask 261120
    %v33 = vsel %vm31, %v18, 0
    %v36 = vsel %vm31, %v19, 0
    %38 = vmatprep.subr.mxu0 0.0
    %39 = vmatpush1.msra.mxu0 %v21
    %40 = vmatprep.subr.mxu0 0.0
    %41 = vmatpush1.msra.mxu0 %v22
    %42 = vmatprep.subr.mxu0 0.0
    %43 = vmatpush1.msra.mxu0 %v23
    %44 = vmatprep.subr.mxu0 0.0
    %45 = vmatpush1.msra.mxu0 %v24
    %46 = vmatprep.subr.mxu0 0.0
    %47 = vmatpush1.msra.mxu0 0.0
    %48 = vmatprep.subr.mxu0 0.0
    %49 = vmatpush1.msra.mxu0 0.0
    %50 = vmatprep.subr.mxu0 0.0
    %51 = vmatpush1.msra.mxu0 0.0
    %52 = vmatprep.subr.mxu0 0.0
    %53 = vmatpush1.msra.mxu0 0.0
    %54 = vmatprep.subr.mxu0 0.0
    %55 = vmatpush1.msra.mxu0 0.0
    %56 = vmatprep.subr.mxu0 0.0
    %57 = vmatpush1.msra.mxu0 0.0
    %58 = vmatprep.subr.mxu0 0.0
    %59 = vmatpush1.msra.mxu0 0.0
    %60 = vmatprep.subr.mxu0 0.0
    %61 = vmatpush1.msra.mxu0 0.0
    %62 = vmatprep.subr.mxu0 0.0
    %63 = vmatpush1.msra.mxu0 0.0
    %64 = vmatprep.subr.mxu0 0.0
    %65 = vmatpush1.msra.mxu0 0.0
    %66 = vmatprep.subr.mxu0 0.0
    %67 = vmatpush1.msra.mxu0 0.0
    %68 = vmatprep.subr.mxu0 0.0
    %69 = vmatpush1.msra.mxu0 0.0
    %70 = vmatprep.subr.mxu0 0.0
    %71 = vmatpush1.msra.mxu0 0.0
    %72 = vmatprep.subr.mxu0 0.0
    %73 = vmatpush1.msra.mxu0 0.0
    %74 = vmatprep.subr.mxu0 0.0
    %75 = vmatpush1.msra.mxu0 0.0
    %76 = vmatprep.subr.mxu0 0.0
    %77 = vmatpush1.msra.mxu0 0.0
    %78 = vmatprep.subr.mxu0 0.0
    %79 = vmatpush1.msra.mxu0 0.0
    %80 = vmatprep.subr.mxu0 0.0
    %81 = vmatpush1.msra.mxu0 0.0
    %82 = vmatprep.subr.mxu0 0.0
    %83 = vmatpush1.msra.mxu0 0.0
    %84 = vmatprep.subr.mxu0 0.0
    %85 = vmatpush1.msra.mxu0 0.0
    %86 = vmatprep.subr.mxu0 0.0
    %87 = vmatpush1.msra.mxu0 0.0
    %88 = vmatprep.subr.mxu0 0.0
    %89 = vmatpush1.msra.mxu0 0.0
    %90 = vmatprep.subr.mxu0 0.0
    %91 = vmatpush1.msra.mxu0 0.0
    %92 = vmatprep.subr.mxu0 0.0
    %93 = vmatpush1.msra.mxu0 0.0
    %94 = vmatprep.subr.mxu0 0.0
    %95 = vmatpush1.msra.mxu0 0.0
    %96 = vmatprep.subr.mxu0 0.0
    %97 = vmatpush1.msra.mxu0 0.0
    %98 = vmatprep.subr.mxu0 0.0
    %99 = vmatpush1.msra.mxu0 0.0
    %100 = vmatprep.subr.mxu0 0.0
    %101 = vmatpush1.msra.mxu0 0.0
    %102 = vmatprep.mubr.f32.mxu0 0.0
    %103 = vmatmul.mubr.f32.gmra.mrb[0].mxu0 %v33
    %v104 = vpop.f32.mrb[0].mxu0
    %v105 = vadd.f32 %v29, %v104
    %v106 = vpop.f32.mrb[0].mxu0
    %107 = vmatprep.mubr.f32.mxu0 0.0
    %108 = vmatmul.mubr.f32.gmra.mrb[0].mxu0 %v36
    %v109 = vpop.f32.mrb[0].mxu0
    %v110 = vadd.f32 %v29, %v109
    %v111 = vpop.f32.mrb[0].mxu0
    %112 = vdwg.mxu0
    %v113 = vxor.u32 %v105, 2147483648
    %v114 = vxor.u32 %v110, 2147483648
    %v115 = vmul.f32 %v113, 1.442695
    %v116 = vpow.pop %v115
    %v117 = vmul.f32 %v114, 1.442695
    %v118 = vpow.pop %v117
    %v119 = vadd.f32 %v116, 1.0
    %v120 = vadd.f32 %v118, 1.0
    %v121 = vrcp.pop %v119
    %v122 = vmul.f32 1.0, %v121
    %v123 = vrcp.pop %v120
    %v124 = vmul.f32 1.0, %v123
    %v125 = vmul.f32 %v105, %v122
    %v126 = vmul.f32 %v110, %v124
    %v127 = vld [vmem:[%s2] sm:$0xff]
    %v128 = vld [vmem:[%s2 + $0x8] sm:$0xff]
    %v129 = vld [vmem:[%s2 + $0x10] sm:$0xff]
    %v130 = vld [vmem:[%s2 + $0x18] sm:$0xff]
    %v131 = vld [vmem:[%s2 + $0x20] sm:$0xff]
    %v132 = vld [vmem:[%s2 + $0x28] sm:$0xff]
    %v133 = vld [vmem:[%s2 + $0x30] sm:$0xff]
    %v134 = vld [vmem:[%s2 + $0x38] sm:$0xff]
    %135 = vrot.lane.b32.xlu0 %v29, 32
    %v136 = vpop.permute.xlu0 %135
    %vm138 = vcmask 523264
    %v140 = vsel %vm138, %v125, 0
    %v143 = vsel %vm138, %v126, 0
    %145 = vmatprep.subr.mxu0 0.0
    %146 = vmatpush1.msra.mxu0 %v127
    %147 = vmatprep.subr.mxu0 0.0
    %148 = vmatpush1.msra.mxu0 %v128
    %149 = vmatprep.subr.mxu0 0.0
    %150 = vmatpush1.msra.mxu0 %v129
    %151 = vmatprep.subr.mxu0 0.0
    %152 = vmatpush1.msra.mxu0 %v130
    %153 = vmatprep.subr.mxu0 0.0
    %154 = vmatpush1.msra.mxu0 %v131
    %155 = vmatprep.subr.mxu0 0.0
    %156 = vmatpush1.msra.mxu0 %v132
    %157 = vmatprep.subr.mxu0 0.0
    %158 = vmatpush1.msra.mxu0 %v133
    %159 = vmatprep.subr.mxu0 0.0
    %160 = vmatpush1.msra.mxu0 %v134
    %161 = vmatprep.subr.mxu0 0.0
    %162 = vmatpush1.msra.mxu0 0.0
    %163 = vmatprep.subr.mxu0 0.0
    %164 = vmatpush1.msra.mxu0 0.0
    %165 = vmatprep.subr.mxu0 0.0
    %166 = vmatpush1.msra.mxu0 0.0
    %167 = vmatprep.subr.mxu0 0.0
    %168 = vmatpush1.msra.mxu0 0.0
    %169 = vmatprep.subr.mxu0 0.0
    %170 = vmatpush1.msra.mxu0 0.0
    %171 = vmatprep.subr.mxu0 0.0
    %172 = vmatpush1.msra.mxu0 0.0
    %173 = vmatprep.subr.mxu0 0.0
    %174 = vmatpush1.msra.mxu0 0.0
    %175 = vmatprep.subr.mxu0 0.0
    %176 = vmatpush1.msra.mxu0 0.0
    %177 = vmatprep.subr.mxu0 0.0
    %178 = vmatpush1.msra.mxu0 0.0
    %179 = vmatprep.subr.mxu0 0.0
    %180 = vmatpush1.msra.mxu0 0.0
    %181 = vmatprep.subr.mxu0 0.0
    %182 = vmatpush1.msra.mxu0 0.0
    %183 = vmatprep.subr.mxu0 0.0
    %184 = vmatpush1.msra.mxu0 0.0
    %185 = vmatprep.subr.mxu0 0.0
    %186 = vmatpush1.msra.mxu0 0.0
    %187 = vmatprep.subr.mxu0 0.0
    %188 = vmatpush1.msra.mxu0 0.0
    %189 = vmatprep.subr.mxu0 0.0
    %190 = vmatpush1.msra.mxu0 0.0
    %191 = vmatprep.subr.mxu0 0.0
    %192 = vmatpush1.msra.mxu0 0.0
    %193 = vmatprep.subr.mxu0 0.0
    %194 = vmatpush1.msra.mxu0 0.0
    %195 = vmatprep.subr.mxu0 0.0
    %196 = vmatpush1.msra.mxu0 0.0
    %197 = vmatprep.subr.mxu0 0.0
    %198 = vmatpush1.msra.mxu0 0.0
    %199 = vmatprep.subr.mxu0 0.0
    %200 = vmatpush1.msra.mxu0 0.0
    %201 = vmatprep.subr.mxu0 0.0
    %202 = vmatpush1.msra.mxu0 0.0
    %203 = vmatprep.subr.mxu0 0.0
    %204 = vmatpush1.msra.mxu0 0.0
    %205 = vmatprep.subr.mxu0 0.0
    %206 = vmatpush1.msra.mxu0 0.0
    %207 = vmatprep.subr.mxu0 0.0
    %208 = vmatpush1.msra.mxu0 0.0
    %209 = vmatprep.mubr.f32.mxu0 0.0
    %210 = vmatmul.mubr.f32.gmra.mrb[0].mxu0 %v140
    %v211 = vpop.f32.mrb[0].mxu0
    %v212 = vadd.f32 %v136, %v211
    %v213 = vpop.f32.mrb[0].mxu0
    %214 = vmatprep.mubr.f32.mxu0 0.0
    %215 = vmatmul.mubr.f32.gmra.mrb[0].mxu0 %v143
    %v216 = vpop.f32.mrb[0].mxu0
    %v217 = vadd.f32 %v136, %v216
    %v218 = vpop.f32.mrb[0].mxu0
    %219 = vdwg.mxu0
    %222 = vrot.lane.b32.xlu0 %v105, 64
    %v223 = vpop.permute.xlu0 %222
    %224 = vrot.lane.b32.xlu0 %v110, 64
    %v225 = vpop.permute.xlu0 %224
    %v228 = vadd.f32 %v212, %v223
    %v229 = vadd.f32 %v217, %v225
    %230 = vst.msk [vmem:[#allocation2] sm:$0xff] %vm31, %v228
    %231 = vst.msk [vmem:[#allocation2 + $0x8] sm:$0xff] %vm31, %v229
    // Predicated region
    $region18: #{tpu_custom_call.1} parent=1 // pred_check
      _
    $region19: #{tpu_custom_call.1} parent=1 // pred_check_branch
      %233 = sbr.rel (0) target = $region21
    $region20: #{tpu_custom_call.1} parent=1 // pred_region
      %s235 = ssub.s32 256, 256
      %236 = vsyncadd [#allocation3], %s235
      %s237 = sshll.u32 [#allocation2], 4
      %s238 = int_to_ptr.vmem [resolvable:$true] %s237
      %243 = dma.vmem_to_hbm [thread:$0]  %s238, 256, %s4, [#allocation3], 128, 128, 8
    $region21: #{tpu_custom_call.1} parent=1 // pred_fallthru
      _
    // Predicated region
    $region22: #{tpu_custom_call.1} parent=1 // pred_check
      _
    $region23: #{tpu_custom_call.1} parent=1 // pred_check_branch
      %245 = sbr.rel (0) target = $region25
    $region24: #{tpu_custom_call.1} parent=1 // pred_region
      %246 = dma.done [#allocation3], 256
    $region25: #{tpu_custom_call.1} parent=1 // pred_fallthru
      _
    %247 = vsyncpa [#allocation3], 1

</llo_original>
